<compile_context>
chip_gen: v7x
topology: tpu7x:2x2x1
jax: 0.10.0
libtpu: 0.0.40
codegen_flags: <defaults>
</compile_context>

<pallas_src>
import math

import jax
import jax.numpy as jnp
from jax.experimental import pallas as pl
from jax.experimental.pallas import tpu as pltpu

FREQ_DIM = 256               # frequency_embedding_size (even -> no zero-pad branch)
HALF = FREQ_DIM // 2
MAX_PERIOD = 10000.0
LANE = 128


def _round_up(x, m):
    return ((x + m - 1) // m) * m


def timestep_embedder_kernel(t_ref, freqs_ref, w1_ref, b1_ref, w2_ref, b2_ref,
                             out_ref, emb_ref):
    """Fused: sinusoidal timestep embedding + Linear -> SiLU -> Linear.

    t_ref    : (TB, 1)        f32   batch tile of timesteps
    freqs_ref: (1, HALF)      f32   precomputed frequency row
    w1_ref   : (FREQ_DIM, Hp) bf16  first Linear weight (rows = [cos part; sin part])
    b1_ref   : (1, Hp)        f32
    w2_ref   : (Hp, Hp)       bf16  second Linear weight
    b2_ref   : (1, Hp)        f32
    out_ref  : (TB, Hp)       out dtype
    emb_ref  : (TB, FREQ_DIM) bf16  VMEM scratch holding [cos | sin]
    """
    args = t_ref[...] * freqs_ref[...]                     # (TB, HALF) f32

    # Assemble concat([cos, sin]) at lane-aligned offsets 0 / 128 (no XLU shuffle),
    # then a single K=256 matmul against the stacked w1.
    # bf16 matmul inputs / f32 MXU accumulation (small deviation vs f32 PyTorch).
    emb_ref[:, :HALF] = jnp.cos(args).astype(emb_ref.dtype)
    emb_ref[:, HALF:] = jnp.sin(args).astype(emb_ref.dtype)

    h = jnp.dot(emb_ref[...], w1_ref[...],
                preferred_element_type=jnp.float32) + b1_ref[...]
    h = h * jax.nn.sigmoid(h)                              # SiLU in f32 (VPU + EUP)

    out = jnp.dot(h.astype(jnp.bfloat16), w2_ref[...],
                  preferred_element_type=jnp.float32) + b2_ref[...]
    out_ref[...] = out.astype(out_ref.dtype)


def prepare_timestep_embedder_params(w1, b1, w2, b2):
    """One-time (parameter-load-time) weight prep: lane-pad + cast matmul weights to bf16.

    Do NOT call per forward step -- the cast/pad reads f32 weights and writes bf16
    copies, which would cost more HBM traffic than the kernel itself.
    """
    hidden = w1.shape[1]
    Hp = _round_up(hidden, LANE)

    def pad2(x, rows, cols):
        if x.shape == (rows, cols):
            return x
        return jnp.zeros((rows, cols), x.dtype).at[:x.shape[0], :x.shape[1]].set(x)

    freqs = jnp.exp((-math.log(MAX_PERIOD) / HALF)
                    * jnp.arange(HALF, dtype=jnp.float32)).reshape(1, HALF)
    return {
        "freqs": freqs,
        "w1": pad2(w1.astype(jnp.bfloat16), FREQ_DIM, Hp),
        "b1": pad2(b1.astype(jnp.float32).reshape(1, hidden), 1, Hp),
        "w2": pad2(w2.astype(jnp.bfloat16), Hp, Hp),
        "b2": pad2(b2.astype(jnp.float32).reshape(1, hidden), 1, Hp),
        "hidden": hidden,
    }


def timestep_embedder(t, params, *, block_b=256, out_dtype=jnp.float32):
    """t: [B] float; params from prepare_timestep_embedder_params.

    Returns [B, hidden] in out_dtype (PyTorch-equivalent forward with bf16 matmul
    inputs / f32 accumulation).
    block_b : batch tile; 256 default, 512 worthwhile on v6e for large B.
    out_dtype: jnp.float32 default; jnp.bfloat16 recommended on v5e.
    """
    freqs, w1p, b1p, w2p, b2p = (params["freqs"], params["w1"], params["b1"],
                                 params["w2"], params["b2"])
    hidden = params["hidden"]
    Hp = w1p.shape[1]
    B = t.shape[0]

    TB = min(block_b, _round_up(B, 8))           # batch tile (multiple of 8 sublanes)
    Bp = _round_up(B, TB)
    nb = Bp // TB

    t2d = t.astype(jnp.float32).reshape(B, 1)
    if Bp != B:
        t2d = jnp.pad(t2d, ((0, Bp - B), (0, 0)))

    out_bytes = jnp.dtype(out_dtype).itemsize
    # Single-buffered resident constants + double-buffered t/out + emb scratch.
    vmem_bytes = (int(w1p.nbytes) + int(w2p.nbytes) + int(b1p.nbytes)
                  + int(b2p.nbytes) + int(freqs.nbytes)
                  + 2 * TB * 4                     # t blocks (double-buffered)
                  + 2 * TB * Hp * out_bytes        # out blocks (double-buffered)
                  + TB * FREQ_DIM * 2)             # emb scratch
    vmem_limit = int(min(max(int(vmem_bytes * 1.5) + (2 << 20), 4 << 20), 100 << 20))

    def const(shape):
        # Constant block: same tile every grid step -> single-buffer it.
        return pl.BlockSpec(shape, lambda i: (0, 0), pipeline_mode=pl.Buffered(1))

    out = pl.pallas_call(
        timestep_embedder_kernel,
        out_shape=jax.ShapeDtypeStruct((Bp, Hp), out_dtype),
        grid=(nb,),
        in_specs=[
            pl.BlockSpec((TB, 1), lambda i: (i, 0)),   # t: blocked over batch
            const((1, HALF)),                          # freqs: resident
            const((FREQ_DIM, Hp)),                     # w1: resident
            const((1, Hp)),                            # b1
            const((Hp, Hp)),                           # w2: resident
            const((1, Hp)),                            # b2
        ],
        out_specs=pl.BlockSpec((TB, Hp), lambda i: (i, 0)),
        scratch_shapes=[pltpu.VMEM((TB, FREQ_DIM), jnp.bfloat16)],
        compiler_params=pltpu.CompilerParams(
            dimension_semantics=("parallel",),         # shard batch across TCs (v7x)
            vmem_limit_bytes=vmem_limit),
    )(t2d, freqs, w1p, b1p, w2p, b2p)

    # TODO(synk): for very large hidden on v7x (Hp >~ 2048, 64 MiB VMEM/TC), add a
    # second "parallel" grid axis tiling w2/b2/out over Hp instead of keeping the
    # full Hp x Hp w2 resident.

    if Bp == B and Hp == hidden:
        return out                                     # no padding -> skip the slice copy
    return out[:B, :hidden]


def reference_f32(t, w1, b1, w2, b2):
    """Pure-JAX f32 reference mirroring the PyTorch module."""
    freqs = jnp.exp(-math.log(MAX_PERIOD)
                    * jnp.arange(HALF, dtype=jnp.float32) / HALF)
    args = t.astype(jnp.float32)[:, None] * freqs[None, :]
    emb = jnp.concatenate([jnp.cos(args), jnp.sin(args)], axis=-1)
    h = emb @ w1 + b1
    h = h * jax.nn.sigmoid(h)
    return h @ w2 + b2


def reference_bf16(t, w1, b1, w2, b2):
    """Reference with the same bf16-matmul / f32-accumulate numerics as the kernel."""
    freqs = jnp.exp(-math.log(MAX_PERIOD)
                    * jnp.arange(HALF, dtype=jnp.float32) / HALF)
    args = t.astype(jnp.float32)[:, None] * freqs[None, :]
    emb = jnp.concatenate([jnp.cos(args), jnp.sin(args)], axis=-1).astype(jnp.bfloat16)
    h = jnp.dot(emb, w1.astype(jnp.bfloat16),
                preferred_element_type=jnp.float32) + b1
    h = h * jax.nn.sigmoid(h)
    return jnp.dot(h.astype(jnp.bfloat16), w2.astype(jnp.bfloat16),
                   preferred_element_type=jnp.float32) + b2


if __name__ == "__main__":
    B = 8
    HIDDEN = 32

    key = jax.random.PRNGKey(0)
    k_t, k_w1, k_b1, k_w2, k_b2 = jax.random.split(key, 5)

    t = jax.random.uniform(k_t, (B,), jnp.float32, 0.0, 1000.0)
    w1 = jax.random.normal(k_w1, (FREQ_DIM, HIDDEN), jnp.float32) * 0.02
    b1 = jax.random.normal(k_b1, (HIDDEN,), jnp.float32) * 0.02
    w2 = jax.random.normal(k_w2, (HIDDEN, HIDDEN), jnp.float32) * 0.02
    b2 = jax.random.normal(k_b2, (HIDDEN,), jnp.float32) * 0.02

    # One-time weight prep (parameter-load time), kernel call is the hot path.
    params = prepare_timestep_embedder_params(w1, b1, w2, b2)
    params = jax.block_until_ready(params)

    out = timestep_embedder(t, params)
    out = jax.block_until_ready(out)
    assert out.shape == (B, HIDDEN)

    # Tight check against a reference using identical bf16-input numerics.
    ref_bf16 = reference_bf16(t, w1, b1, w2, b2)
    assert jnp.allclose(out, ref_bf16, atol=2e-3, rtol=2e-3), "mismatch vs bf16-matched reference"

    # Sanity check against the full-f32 PyTorch-equivalent reference.
    ref_f32 = reference_f32(t, w1, b1, w2, b2)
    assert jnp.allclose(out, ref_f32, atol=5e-2, rtol=5e-2), "mismatch vs f32 reference"

    print("KERNEL_OK")
</pallas_src>

<mosaic_0001>
module attributes {stable_mosaic.version = 11 : i64} {
  func.func @timestep_embedder_kernel(%arg0: i32, %arg1: memref<8x1xf32, #tpu.memory_space<vmem>>, %arg2: memref<1x128xf32, #tpu.memory_space<vmem>>, %arg3: memref<256x128xbf16, #tpu.memory_space<vmem>>, %arg4: memref<1x128xf32, #tpu.memory_space<vmem>>, %arg5: memref<128x128xbf16, #tpu.memory_space<vmem>>, %arg6: memref<1x128xf32, #tpu.memory_space<vmem>>, %arg7: memref<8x128xf32, #tpu.memory_space<vmem>>, %arg8: memref<8x256xbf16, #tpu.memory_space<vmem>>) attributes {dimension_semantics = [#tpu.dimension_semantics<parallel>], iteration_bounds = array<i64: 1>, scalar_prefetch = 0 : i64, scratch_operands = 1 : i64, tpu.core_type = #tpu.core_type<tc>, window_params = [{transform_indices = @transform_0, window_bounds = array<i64: 8, 1>}, {pipeline_mode = #tpu.pipeline_mode<synchronous>, transform_indices = @transform_1, window_bounds = array<i64: 1, 128>}, {pipeline_mode = #tpu.pipeline_mode<synchronous>, transform_indices = @transform_2, window_bounds = array<i64: 256, 128>}, {pipeline_mode = #tpu.pipeline_mode<synchronous>, transform_indices = @transform_3, window_bounds = array<i64: 1, 128>}, {pipeline_mode = #tpu.pipeline_mode<synchronous>, transform_indices = @transform_4, window_bounds = array<i64: 128, 128>}, {pipeline_mode = #tpu.pipeline_mode<synchronous>, transform_indices = @transform_5, window_bounds = array<i64: 1, 128>}, {transform_indices = @transform_6, window_bounds = array<i64: 8, 128>}]} {
    %c0 = arith.constant 0 : index
    %c0_0 = arith.constant 0 : index
    %0 = vector.load %arg1[%c0, %c0_0] : memref<8x1xf32, #tpu.memory_space<vmem>>, vector<8x1xf32>
    %c0_1 = arith.constant 0 : index
    %c0_2 = arith.constant 0 : index
    %1 = vector.load %arg2[%c0_1, %c0_2] : memref<1x128xf32, #tpu.memory_space<vmem>>, vector<1x128xf32>
    %2 = vector.broadcast %0 : vector<8x1xf32> to vector<8x128xf32>
    %3 = vector.broadcast %1 : vector<1x128xf32> to vector<8x128xf32>
    %4 = arith.mulf %2, %3 : vector<8x128xf32>
    %5 = math.cos %4 : vector<8x128xf32>
    %6 = arith.truncf %5 : vector<8x128xf32> to vector<8x128xbf16>
    %c0_3 = arith.constant 0 : index
    %c0_4 = arith.constant 0 : index
    %7 = vector.load %arg8[%c0_3, %c0_4] : memref<8x256xbf16, #tpu.memory_space<vmem>>, vector<8x128xbf16>
    tpu.vector_store %arg8[%c0_3, %c0_4], %6 {strides = array<i32>} : memref<8x256xbf16, #tpu.memory_space<vmem>>, vector<8x128xbf16>,
    %8 = math.sin %4 : vector<8x128xf32>
    %9 = arith.truncf %8 : vector<8x128xf32> to vector<8x128xbf16>
    %c0_5 = arith.constant 0 : index
    %c128 = arith.constant 128 : index
    %10 = vector.load %arg8[%c0_5, %c128] : memref<8x256xbf16, #tpu.memory_space<vmem>>, vector<8x128xbf16>
    tpu.vector_store %arg8[%c0_5, %c128], %9 {strides = array<i32>} : memref<8x256xbf16, #tpu.memory_space<vmem>>, vector<8x128xbf16>,
    %c0_6 = arith.constant 0 : index
    %c0_7 = arith.constant 0 : index
    %11 = vector.load %arg8[%c0_6, %c0_7] : memref<8x256xbf16, #tpu.memory_space<vmem>>, vector<8x256xbf16>
    %c0_8 = arith.constant 0 : index
    %c0_9 = arith.constant 0 : index
    %12 = vector.load %arg3[%c0_8, %c0_9] : memref<256x128xbf16, #tpu.memory_space<vmem>>, vector<256x128xbf16>
    %cst = arith.constant dense<0.000000e+00> : vector<8x128xf32>
    %13 = tpu.matmul %11, %12, %cst {dimension_numbers = #tpu.dot_dimension_numbers<[1], [0], [0], [1], [0, 0, 1, 1], [], []>} : vector<8x256xbf16>, vector<256x128xbf16>, vector<8x128xf32> -> vector<8x128xf32>
    %c0_10 = arith.constant 0 : index
    %c0_11 = arith.constant 0 : index
    %14 = vector.load %arg4[%c0_10, %c0_11] : memref<1x128xf32, #tpu.memory_space<vmem>>, vector<1x128xf32>
    %15 = vector.broadcast %14 : vector<1x128xf32> to vector<8x128xf32>
    %16 = arith.addf %13, %15 : vector<8x128xf32>
    %17 = arith.negf %16 : vector<8x128xf32>
    %18 = math.exp %17 : vector<8x128xf32>
    %cst_12 = arith.constant 1.000000e+00 : f32
    %19 = vector.broadcast %cst_12 : f32 to vector<8x128xf32>
    %20 = arith.addf %19, %18 : vector<8x128xf32>
    %21 = arith.divf %19, %20 : vector<8x128xf32>
    %22 = arith.mulf %16, %21 : vector<8x128xf32>
    %23 = arith.truncf %22 : vector<8x128xf32> to vector<8x128xbf16>
    %c0_13 = arith.constant 0 : index
    %c0_14 = arith.constant 0 : index
    %24 = vector.load %arg5[%c0_13, %c0_14] : memref<128x128xbf16, #tpu.memory_space<vmem>>, vector<128x128xbf16>
    %cst_15 = arith.constant dense<0.000000e+00> : vector<8x128xf32>
    %25 = tpu.matmul %23, %24, %cst_15 {dimension_numbers = #tpu.dot_dimension_numbers<[1], [0], [0], [1], [0, 0, 1, 1], [], []>} : vector<8x128xbf16>, vector<128x128xbf16>, vector<8x128xf32> -> vector<8x128xf32>
    %c0_16 = arith.constant 0 : index
    %c0_17 = arith.constant 0 : index
    %26 = vector.load %arg6[%c0_16, %c0_17] : memref<1x128xf32, #tpu.memory_space<vmem>>, vector<1x128xf32>
    %27 = vector.broadcast %26 : vector<1x128xf32> to vector<8x128xf32>
    %28 = arith.addf %25, %27 : vector<8x128xf32>
    %c0_18 = arith.constant 0 : index
    %c0_19 = arith.constant 0 : index
    %29 = vector.load %arg7[%c0_18, %c0_19] : memref<8x128xf32, #tpu.memory_space<vmem>>, vector<8x128xf32>
    tpu.vector_store %arg7[%c0_18, %c0_19], %28 {strides = array<i32>} : memref<8x128xf32, #tpu.memory_space<vmem>>, vector<8x128xf32>,
    return
  }
  func.func @transform_0(%arg0: i32) -> (i32, i32) {
    %c0_i32 = arith.constant 0 : i32
    %c0_i32_0 = arith.constant 0 : i32
    return %arg0, %c0_i32 : i32, i32
  }
  func.func @transform_1(%arg0: i32) -> (i32, i32) {
    %c0_i32 = arith.constant 0 : i32
    %c0_i32_0 = arith.constant 0 : i32
    %c0_i32_1 = arith.constant 0 : i32
    return %c0_i32, %c0_i32_0 : i32, i32
  }
  func.func @transform_2(%arg0: i32) -> (i32, i32) {
    %c0_i32 = arith.constant 0 : i32
    %c0_i32_0 = arith.constant 0 : i32
    %c0_i32_1 = arith.constant 0 : i32
    return %c0_i32, %c0_i32_0 : i32, i32
  }
  func.func @transform_3(%arg0: i32) -> (i32, i32) {
    %c0_i32 = arith.constant 0 : i32
    %c0_i32_0 = arith.constant 0 : i32
    %c0_i32_1 = arith.constant 0 : i32
    return %c0_i32, %c0_i32_0 : i32, i32
  }
  func.func @transform_4(%arg0: i32) -> (i32, i32) {
    %c0_i32 = arith.constant 0 : i32
    %c0_i32_0 = arith.constant 0 : i32
    %c0_i32_1 = arith.constant 0 : i32
    return %c0_i32, %c0_i32_0 : i32, i32
  }
  func.func @transform_5(%arg0: i32) -> (i32, i32) {
    %c0_i32 = arith.constant 0 : i32
    %c0_i32_0 = arith.constant 0 : i32
    %c0_i32_1 = arith.constant 0 : i32
    return %c0_i32, %c0_i32_0 : i32, i32
  }
  func.func @transform_6(%arg0: i32) -> (i32, i32) {
    %c0_i32 = arith.constant 0 : i32
    %c0_i32_0 = arith.constant 0 : i32
    return %arg0, %c0_i32 : i32, i32
  }
}

</mosaic_0001>

<llo_original>
// kernel: tpu_custom_call.1
$region0: #{tpu_custom_call.1}
  #allocation0 [shape = 'u32[]', space=smem, size = 0x4, offset = 0x4, fixed_abs, tag = 'smem constant byte address 0x4 - core index']
  #allocation1 [shape = 'u32[144,128]{1,0:T(1,128)}', space=vmem, size = 0x12000, scoped, tag = 'internal scratch']
  #allocation2 [shape = 'bf16[8,256]{1,0:T(8,128)(2,1)}', space=vmem, size = 0x1000, scoped, tag = 'scratch operand']
  %s0 = inlined_call_operand.vmem [shape: f32[8,1], index: 0, kind: input, shape index: {}]
  %s1 = inlined_call_operand.vmem [shape: f32[1,128], index: 1, kind: input, shape index: {}]
  %s2 = inlined_call_operand.hbm [shape: bf16[256,128], index: 2, kind: input, shape index: {}]
  %s3 = inlined_call_operand.vmem [shape: f32[1,128], index: 3, kind: input, shape index: {}]
  %s4 = inlined_call_operand.hbm [shape: bf16[128,128], index: 4, kind: input, shape index: {}]
  %s5 = inlined_call_operand.vmem [shape: f32[1,128], index: 5, kind: input, shape index: {}]
  %s6 = inlined_call_operand.hbm [shape: f32[8,128], index: 6, kind: output, shape index: {}]
  %s7 = sld [smem:[#allocation0]]
  $region42: #{tpu_custom_call.1} parent=0
    _
  %s9 = ssub.s32 1, %s7
  %s10 = scalar_select 0, %s9, %s7
  $region1: #{tpu_custom_call.1} parent=0
    #allocation3 [shape = 'u8[65536]{0}', space=vmem, size = 0x10000, scoped, tag = 'input window, operand 2, single buffered']
    #allocation4 [shape = 's32[1]{0}', space=sflag, size = 0x4, scoped, tag = 'scoped memory for tpu_custom_call.1']
    #allocation5 [shape = 's32[1]{0}', space=sflag, size = 0x4, scoped, tag = 'scoped memory for tpu_custom_call.1']
    #allocation6 [shape = 'u8[32768]{0}', space=vmem, size = 0x8000, scoped, tag = 'input window, operand 4, single buffered']
    #allocation7 [shape = 's32[1]{0}', space=sflag, size = 0x4, scoped, tag = 'scoped memory for tpu_custom_call.1']
    #allocation8 [shape = 'u8[4096]{0}', space=vmem, size = 0x1000, scoped, tag = 'output window, operand 0, single buffered']
    %11 = vsyncpa [#allocation4], 0
    %12 = vsyncpa [#allocation7], 0
    %13 = vsyncpa [#allocation5], 0
    // Predicated region
    $region2: #{tpu_custom_call.1} parent=1 // pred_check
      _
    $region3: #{tpu_custom_call.1} parent=1 // pred_check_branch
      %15 = sbr.rel (0) target = $region5
    $region4: #{tpu_custom_call.1} parent=1 // pred_region
      _
    $region5: #{tpu_custom_call.1} parent=1 // pred_fallthru
      _
    // Predicated region
    $region6: #{tpu_custom_call.1} parent=1 // pred_check
      _
    $region7: #{tpu_custom_call.1} parent=1 // pred_check_branch
      %17 = sbr.rel (0) target = $region9
    $region8: #{tpu_custom_call.1} parent=1 // pred_region
      _
    $region9: #{tpu_custom_call.1} parent=1 // pred_fallthru
      _
    // Predicated region
    $region10: #{tpu_custom_call.1} parent=1 // pred_check
      _
    $region11: #{tpu_custom_call.1} parent=1 // pred_check_branch
      %19 = sbr.rel (0) target = $region13
    $region12: #{tpu_custom_call.1} parent=1 // pred_region
      %s21 = ssub.s32 2048, 2048
      %22 = vsyncadd [#allocation4], %s21
      %s23 = sshll.u32 [#allocation3], 4
      %s24 = int_to_ptr.vmem [resolvable:$true] %s23
      %29 = dma.hbm_to_vmem [thread:$0]  %s2, 2048, %s24, [#allocation4], 64, 64, 4
    $region13: #{tpu_custom_call.1} parent=1 // pred_fallthru
      _
    // Predicated region
    $region14: #{tpu_custom_call.1} parent=1 // pred_check
      _
    $region15: #{tpu_custom_call.1} parent=1 // pred_check_branch
      %31 = sbr.rel (0) target = $region17
    $region16: #{tpu_custom_call.1} parent=1 // pred_region
      _
    $region17: #{tpu_custom_call.1} parent=1 // pred_fallthru
      _
    // Predicated region
    $region18: #{tpu_custom_call.1} parent=1 // pred_check
      _
    $region19: #{tpu_custom_call.1} parent=1 // pred_check_branch
      %33 = sbr.rel (0) target = $region21
    $region20: #{tpu_custom_call.1} parent=1 // pred_region
      %s35 = ssub.s32 1024, 1024
      %36 = vsyncadd [#allocation7], %s35
      %s37 = sshll.u32 [#allocation6], 4
      %s38 = int_to_ptr.vmem [resolvable:$true] %s37
      %43 = dma.hbm_to_vmem [thread:$0]  %s4, 1024, %s38, [#allocation7], 64, 64, 4
    $region21: #{tpu_custom_call.1} parent=1 // pred_fallthru
      _
    // Predicated region
    $region22: #{tpu_custom_call.1} parent=1 // pred_check
      _
    $region23: #{tpu_custom_call.1} parent=1 // pred_check_branch
      %45 = sbr.rel (0) target = $region25
    $region24: #{tpu_custom_call.1} parent=1 // pred_region
      _
    $region25: #{tpu_custom_call.1} parent=1 // pred_fallthru
      _
    // Predicated region
    $region26: #{tpu_custom_call.1} parent=1 // pred_check
      _
    $region27: #{tpu_custom_call.1} parent=1 // pred_check_branch
      %47 = sbr.rel (0) target = $region29
    $region28: #{tpu_custom_call.1} parent=1 // pred_region
      %48 = dma.done [#allocation4], 2048
    $region29: #{tpu_custom_call.1} parent=1 // pred_fallthru
      _
    // Predicated region
    $region30: #{tpu_custom_call.1} parent=1 // pred_check
      _
    $region31: #{tpu_custom_call.1} parent=1 // pred_check_branch
      %50 = sbr.rel (0) target = $region33
    $region32: #{tpu_custom_call.1} parent=1 // pred_region
      %51 = dma.done [#allocation7], 1024
    $region33: #{tpu_custom_call.1} parent=1 // pred_fallthru
      _
    %v53 = vld [vmem:[%s0] sm:$0xff]
    %v54 = vld [vmem:[%s1] sm:$0x1]
    %56 = vset.pattern.permute.xlu0 0
    %57 = vperm.xlu0 %56, %v53
    %v58 = vpop.permute.xlu0 %57
    %v61 = vlaneseq
    %v62 = vshrl.u32 %v61, 7
    %v63 = vsub.s32 0, %v62
    %v64 = vrot.slane %v54, %v63
    %v66 = vmul.f32 %v58, %v64
    %v67 = vand.u32 2147483647, %v66
    %vm68 = vcmp.le.f32.partialorder %v67, 0.7853982
    %vm69 = vcmp.lt.s32.totalorder %v66, 0
    %v70 = vand.u32 %v66, 2139095040
    %v71 = vshrl.u32 %v70, 23
    %v72 = vsub.s32 %v71, 127
    %v73 = vand.u32 2147483647, %v66
    %v74 = vand.u32 %v73, 8388607
    %v75 = vor.u32 %v74, 8388608
    %v76 = vsub.s32 0, %v75
    %v77 = vadd.s32 %v72, 1
    %vm78 = vcmp.gt.s32.totalorder %v77, 0
    %v79 = vsel %vm78, %v77, 0
    %v80 = vshrl.u32 %v79, 5
    %v81 = vand.u32 %v79, 31
    %v82 = vsub.s32 32, %v81
    %v83 = vshrl.u32 683565275, %v82
    %v84 = vshll.u32 683565275, %v81
    %v85 = vshrl.u32 2475754826, %v82
    %v86 = vor.u32 %v84, %v85
    %v87 = vshll.u32 2475754826, %v81
    %v88 = vshrl.u32 2131351028, %v82
    %v89 = vor.u32 %v87, %v88
    %v90 = vshll.u32 2131351028, %v81
    %v91 = vshrl.u32 2102212464, %v82
    %v92 = vor.u32 %v90, %v91
    %v93 = vshll.u32 2102212464, %v81
    %v94 = vshrl.u32 920167782, %v82
    %v95 = vor.u32 %v93, %v94
    %v96 = vshll.u32 920167782, %v81
    %v97 = vshrl.u32 1326507024, %v82
    %v98 = vor.u32 %v96, %v97
    %vm99 = vcmp.lt.s32.totalorder %v80, 1
    %vm100 = vcmp.lt.s32.totalorder %v80, 2
    %vm101 = vcmp.lt.s32.totalorder %v80, 3
    %vm102 = vcmp.lt.s32.totalorder %v80, 4
    %v103 = vsel %vm99, %v83, %v86
    %v104 = vsel %vm102, %v92, 2102212464
    %v105 = vsel %vm101, %v89, %v104
    %v106 = vsel %vm100, %v103, %v105
    %v107 = vsel %vm99, %v86, %v89
    %v108 = vsel %vm102, %v95, 920167782
    %v109 = vsel %vm101, %v92, %v108
    %v110 = vsel %vm100, %v107, %v109
    %v111 = vsel %vm99, %v89, %v92
    %v112 = vsel %vm102, %v98, 1326507024
    %v113 = vsel %vm101, %v95, %v112
    %v114 = vsel %vm100, %v111, %v113
    %v115 = vshll.u32 %v75, 8
    %v116 = vmul.u32.u64.compose %v115, %v114
    %v117 = vextract.low.u32 %v116
    %v118 = vextract.high.u32 %v116
    %v119 = vmul.u32.u64.compose %v115, %v110
    %v120 = vextract.low.u32 %v119
    %v121 = vextract.high.u32 %v119
    %v122 = vmul.u32 %v115, %v106
    %v123 = vadd.s32 %v118, %v120
    %vm124 = vc.u32 %v118, %v120
    %v125 = vadd.s32 %v121, 1
    %v126 = vsel %vm124, %v125, %v121
    %v127 = vadd.s32 %v122, %v126
    %v128 = vadd.s32 %v127, 536870912
    %v129 = vshrl.u32 %v128, 30
    %v130 = vshll.u32 %v129, 30
    %v131 = vsub.s32 %v127, %v130
    %vm132 = vcmp.lt.s32.totalorder %v131, 0
    %v133 = vsub.s32 0, %v131
    %v134 = vsel %vm132, %v133, %v131
    %v135 = vclz %v134
    %v136 = vsub.s32 %v135, 2
    %vm137 = vcmp.gt.s32.totalorder 0, %v136
    %v138 = vsel %vm137, 0, %v136
    %v139 = vsub.s32 32, %v138
    %v140 = vshll.u32 %v131, %v138
    %v141 = vshrl.u32 %v123, %v139
    %v142 = vor.u32 %v140, %v141
    %v143 = vsub.s32 4294967266, %v138
    %v144 = vadd.s32 %v143, 127
    %v145 = vshll.u32 %v144, 23
    %v146 = vor.u32 4788187, %v145
    %v147 = vand.u32 2147483647, %v146
    %v149 = vcvt.s32.f32 %v142
    %v150 = vmul.f32 %v149, %v147
    %v151 = vxor.u32 %v150, 2147483648
    %v152 = vsel %vm69, %v151, %v150
    %v153 = vsub.s32 4, %v129
    %v154 = vsel %vm69, %v153, %v129
    %v155 = vsel %vm68, %v66, %v152
    %v156 = vsel %vm68, 0, %v154
    %v157 = vcosq.f32.pop %v155
    %v158 = vsinq.f32.pop %v155
    %vm159 = vweird.f32 %v66
    %v160 = vand.u32 %v156, 3
    %vm161 = vcmp.lt.s32.totalorder %v160, 2
    %vm162 = vcmp.eq.s32.totalorder %v160, 0
    %v163 = vxor.u32 %v158, 2147483648
    %v164 = vsel %vm162, %v157, %v163
    %vm165 = vcmp.eq.s32.totalorder %v160, 2
    %v166 = vxor.u32 %v157, 2147483648
    %v167 = vsel %vm165, %v166, %v158
    %v168 = vsel %vm161, %v164, %v167
    %v169 = vsel %vm159, nan, %v168
    %v170 = vpack.c.bf16 %v169, %v169
    %171 = vst [vmem:[#allocation2] sm:$0xf] %v170
    %v172 = vand.u32 2147483647, %v66
    %vm173 = vcmp.le.f32.partialorder %v172, 0.7853982
    %vm174 = vcmp.lt.s32.totalorder %v66, 0
    %v175 = vand.u32 %v66, 2139095040
    %v176 = vshrl.u32 %v175, 23
    %v177 = vsub.s32 %v176, 127
    %v178 = vand.u32 2147483647, %v66
    %v179 = vand.u32 %v178, 8388607
    %v180 = vor.u32 %v179, 8388608
    %v181 = vsub.s32 0, %v180
    %v182 = vadd.s32 %v177, 1
    %vm183 = vcmp.gt.s32.totalorder %v182, 0
    %v184 = vsel %vm183, %v182, 0
    %v185 = vshrl.u32 %v184, 5
    %v186 = vand.u32 %v184, 31
    %v187 = vsub.s32 32, %v186
    %v188 = vshrl.u32 683565275, %v187
    %v189 = vshll.u32 683565275, %v186
    %v190 = vshrl.u32 2475754826, %v187
    %v191 = vor.u32 %v189, %v190
    %v192 = vshll.u32 2475754826, %v186
    %v193 = vshrl.u32 2131351028, %v187
    %v194 = vor.u32 %v192, %v193
    %v195 = vshll.u32 2131351028, %v186
    %v196 = vshrl.u32 2102212464, %v187
    %v197 = vor.u32 %v195, %v196
    %v198 = vshll.u32 2102212464, %v186
    %v199 = vshrl.u32 920167782, %v187
    %v200 = vor.u32 %v198, %v199
    %v201 = vshll.u32 920167782, %v186
    %v202 = vshrl.u32 1326507024, %v187
    %v203 = vor.u32 %v201, %v202
    %vm204 = vcmp.lt.s32.totalorder %v185, 1
    %vm205 = vcmp.lt.s32.totalorder %v185, 2
    %vm206 = vcmp.lt.s32.totalorder %v185, 3
    %vm207 = vcmp.lt.s32.totalorder %v185, 4
    %v208 = vsel %vm204, %v188, %v191
    %v209 = vsel %vm207, %v197, 2102212464
    %v210 = vsel %vm206, %v194, %v209
    %v211 = vsel %vm205, %v208, %v210
    %v212 = vsel %vm204, %v191, %v194
    %v213 = vsel %vm207, %v200, 920167782
    %v214 = vsel %vm206, %v197, %v213
    %v215 = vsel %vm205, %v212, %v214
    %v216 = vsel %vm204, %v194, %v197
    %v217 = vsel %vm207, %v203, 1326507024
    %v218 = vsel %vm206, %v200, %v217
    %v219 = vsel %vm205, %v216, %v218
    %v220 = vshll.u32 %v180, 8
    %v221 = vmul.u32.u64.compose %v220, %v219
    %v222 = vextract.low.u32 %v221
    %v223 = vextract.high.u32 %v221
    %v224 = vmul.u32.u64.compose %v220, %v215
    %v225 = vextract.low.u32 %v224
    %v226 = vextract.high.u32 %v224
    %v227 = vmul.u32 %v220, %v211
    %v228 = vadd.s32 %v223, %v225
    %vm229 = vc.u32 %v223, %v225
    %v230 = vadd.s32 %v226, 1
    %v231 = vsel %vm229, %v230, %v226
    %v232 = vadd.s32 %v227, %v231
    %v233 = vadd.s32 %v232, 536870912
    %v234 = vshrl.u32 %v233, 30
    %v235 = vshll.u32 %v234, 30
    %v236 = vsub.s32 %v232, %v235
    %vm237 = vcmp.lt.s32.totalorder %v236, 0
    %v238 = vsub.s32 0, %v236
    %v239 = vsel %vm237, %v238, %v236
    %v240 = vclz %v239
    %v241 = vsub.s32 %v240, 2
    %vm242 = vcmp.gt.s32.totalorder 0, %v241
    %v243 = vsel %vm242, 0, %v241
    %v244 = vsub.s32 32, %v243
    %v245 = vshll.u32 %v236, %v243
    %v246 = vshrl.u32 %v228, %v244
    %v247 = vor.u32 %v245, %v246
    %v248 = vsub.s32 4294967266, %v243
    %v249 = vadd.s32 %v248, 127
    %v250 = vshll.u32 %v249, 23
    %v251 = vor.u32 4788187, %v250
    %v252 = vand.u32 2147483647, %v251
    %v254 = vcvt.s32.f32 %v247
    %v255 = vmul.f32 %v254, %v252
    %v256 = vxor.u32 %v255, 2147483648
    %v257 = vsel %vm174, %v256, %v255
    %v258 = vsub.s32 4, %v234
    %v259 = vsel %vm174, %v258, %v234
    %v260 = vsel %vm173, %v66, %v257
    %v261 = vsel %vm173, 0, %v259
    %v262 = vcosq.f32.pop %v260
    %v263 = vsinq.f32.pop %v260
    %vm264 = vweird.f32 %v66
    %v265 = vadd.s32 %v261, 3
    %v266 = vand.u32 %v265, 3
    %vm267 = vcmp.lt.s32.totalorder %v266, 2
    %vm268 = vcmp.eq.s32.totalorder %v266, 0
    %v269 = vxor.u32 %v263, 2147483648
    %v270 = vsel %vm268, %v262, %v269
    %vm271 = vcmp.eq.s32.totalorder %v266, 2
    %v272 = vxor.u32 %v262, 2147483648
    %v273 = vsel %vm271, %v272, %v263
    %v274 = vsel %vm267, %v270, %v273
    %v275 = vsel %vm264, nan, %v274
    %v276 = vpack.c.bf16 %v275, %v275
    %277 = vst [vmem:[#allocation2 + $0x4] sm:$0xf] %v276
    %v278 = vld [vmem:[#allocation2] sm:$0xff]
    %v279 = vld [vmem:[#allocation3] sm:$0xf]
    %v280 = vld [vmem:[#allocation3 + $0x4] sm:$0xf]
    %v281 = vld [vmem:[#allocation3 + $0x8] sm:$0xf]
    %v282 = vld [vmem:[#allocation3 + $0xc] sm:$0xf]
    %v283 = vld [vmem:[#allocation3 + $0x10] sm:$0xf]
    %v284 = vld [vmem:[#allocation3 + $0x14] sm:$0xf]
    %v285 = vld [vmem:[#allocation3 + $0x18] sm:$0xf]
    %v286 = vld [vmem:[#allocation3 + $0x1c] sm:$0xf]
    %v287 = vld [vmem:[#allocation3 + $0x20] sm:$0xf]
    %v288 = vld [vmem:[#allocation3 + $0x24] sm:$0xf]
    %v289 = vld [vmem:[#allocation3 + $0x28] sm:$0xf]
    %v290 = vld [vmem:[#allocation3 + $0x2c] sm:$0xf]
    %v291 = vld [vmem:[#allocation3 + $0x30] sm:$0xf]
    %v292 = vld [vmem:[#allocation3 + $0x34] sm:$0xf]
    %v293 = vld [vmem:[#allocation3 + $0x38] sm:$0xf]
    %v294 = vld [vmem:[#allocation3 + $0x3c] sm:$0xf]
    %v295 = vld [vmem:[#allocation3 + $0x40] sm:$0xf]
    %v296 = vld [vmem:[#allocation3 + $0x44] sm:$0xf]
    %v297 = vld [vmem:[#allocation3 + $0x48] sm:$0xf]
    %v298 = vld [vmem:[#allocation3 + $0x4c] sm:$0xf]
    %v299 = vld [vmem:[#allocation3 + $0x50] sm:$0xf]
    %v300 = vld [vmem:[#allocation3 + $0x54] sm:$0xf]
    %v301 = vld [vmem:[#allocation3 + $0x58] sm:$0xf]
    %v302 = vld [vmem:[#allocation3 + $0x5c] sm:$0xf]
    %v303 = vld [vmem:[#allocation3 + $0x60] sm:$0xf]
    %v304 = vld [vmem:[#allocation3 + $0x64] sm:$0xf]
    %v305 = vld [vmem:[#allocation3 + $0x68] sm:$0xf]
    %v306 = vld [vmem:[#allocation3 + $0x6c] sm:$0xf]
    %v307 = vld [vmem:[#allocation3 + $0x70] sm:$0xf]
    %v308 = vld [vmem:[#allocation3 + $0x74] sm:$0xf]
    %v309 = vld [vmem:[#allocation3 + $0x78] sm:$0xf]
    %v310 = vld [vmem:[#allocation3 + $0x7c] sm:$0xf]
    %v311 = vld [vmem:[%s3] sm:$0x1]
    %v313 = vlaneseq
    %v314 = vshrl.u32 %v313, 7
    %v315 = vsub.s32 0, %v314
    %v316 = vrot.slane %v311, %v315
    %v319 = vunpack.c.l.b16 %v278
    %v320 = vunpack.c.h.b16 %v278
    %v321 = vpack.c.b16 %v319, %v319
    %v322 = vpack.c.b16 %v320, %v320
    %v357 = vunpack.c.l.b16 %v279
    %v358 = vunpack.c.l.b16 %v280
    %v359 = vunpack.c.l.b16 %v281
    %v360 = vunpack.c.l.b16 %v282
    %v361 = vunpack.c.l.b16 %v283
    %v362 = vunpack.c.l.b16 %v284
    %v363 = vunpack.c.l.b16 %v285
    %v364 = vunpack.c.l.b16 %v286
    %v365 = vunpack.c.l.b16 %v287
    %v366 = vunpack.c.l.b16 %v288
    %v367 = vunpack.c.l.b16 %v289
    %v368 = vunpack.c.l.b16 %v290
    %v369 = vunpack.c.l.b16 %v291
    %v370 = vunpack.c.l.b16 %v292
    %v371 = vunpack.c.l.b16 %v293
    %v372 = vunpack.c.l.b16 %v294
    %v373 = vunpack.c.l.b16 %v295
    %v374 = vunpack.c.l.b16 %v296
    %v375 = vunpack.c.l.b16 %v297
    %v376 = vunpack.c.l.b16 %v298
    %v377 = vunpack.c.l.b16 %v299
    %v378 = vunpack.c.l.b16 %v300
    %v379 = vunpack.c.l.b16 %v301
    %v380 = vunpack.c.l.b16 %v302
    %v381 = vunpack.c.l.b16 %v303
    %v382 = vunpack.c.l.b16 %v304
    %v383 = vunpack.c.l.b16 %v305
    %v384 = vunpack.c.l.b16 %v306
    %v385 = vunpack.c.l.b16 %v307
    %v386 = vunpack.c.l.b16 %v308
    %v387 = vunpack.c.l.b16 %v309
    %v388 = vunpack.c.l.b16 %v310
    %v389 = vpack.c.b16 %v358, %v357
    %v390 = vpack.c.b16 %v360, %v359
    %v391 = vpack.c.b16 %v362, %v361
    %v392 = vpack.c.b16 %v364, %v363
    %v393 = vpack.c.b16 %v366, %v365
    %v394 = vpack.c.b16 %v368, %v367
    %v395 = vpack.c.b16 %v370, %v369
    %v396 = vpack.c.b16 %v372, %v371
    %v397 = vpack.c.b16 %v374, %v373
    %v398 = vpack.c.b16 %v376, %v375
    %v399 = vpack.c.b16 %v378, %v377
    %v400 = vpack.c.b16 %v380, %v379
    %v401 = vpack.c.b16 %v382, %v381
    %v402 = vpack.c.b16 %v384, %v383
    %v403 = vpack.c.b16 %v386, %v385
    %v404 = vpack.c.b16 %v388, %v387
    %421 = vmatprep.subr.bf16.mxu0 0
    %422 = vmatpush1.bf16.msra.mxu0 %v389
    %423 = vmatprep.subr.bf16.mxu0 0
    %424 = vmatpush1.bf16.msra.mxu0 %v390
    %425 = vmatprep.subr.bf16.mxu0 0
    %426 = vmatpush1.bf16.msra.mxu0 %v391
    %427 = vmatprep.subr.bf16.mxu0 0
    %428 = vmatpush1.bf16.msra.mxu0 %v392
    %429 = vmatprep.subr.bf16.mxu0 0
    %430 = vmatpush1.bf16.msra.mxu0 %v393
    %431 = vmatprep.subr.bf16.mxu0 0
    %432 = vmatpush1.bf16.msra.mxu0 %v394
    %433 = vmatprep.subr.bf16.mxu0 0
    %434 = vmatpush1.bf16.msra.mxu0 %v395
    %435 = vmatprep.subr.bf16.mxu0 0
    %436 = vmatpush1.bf16.msra.mxu0 %v396
    %437 = vmatprep.subr.bf16.mxu0 0
    %438 = vmatpush1.bf16.msra.mxu0 %v397
    %439 = vmatprep.subr.bf16.mxu0 0
    %440 = vmatpush1.bf16.msra.mxu0 %v398
    %441 = vmatprep.subr.bf16.mxu0 0
    %442 = vmatpush1.bf16.msra.mxu0 %v399
    %443 = vmatprep.subr.bf16.mxu0 0
    %444 = vmatpush1.bf16.msra.mxu0 %v400
    %445 = vmatprep.subr.bf16.mxu0 0
    %446 = vmatpush1.bf16.msra.mxu0 %v401
    %447 = vmatprep.subr.bf16.mxu0 0
    %448 = vmatpush1.bf16.msra.mxu0 %v402
    %449 = vmatprep.subr.bf16.mxu0 0
    %450 = vmatpush1.bf16.msra.mxu0 %v403
    %451 = vmatprep.subr.bf16.mxu0 0
    %452 = vmatpush1.bf16.msra.mxu0 %v404
    %453 = vmatprep.mubr.bf16.mxu0 %v322
    %454 = vmatmul.mubr.bf16.gmra.mrb[0].mxu0 %v321
    %v455 = vpop.f32.mrb[0].mxu0
    %v456 = vadd.f32 %v316, %v455
    %v457 = vpop.f32.mrb[0].mxu0
    %v458 = vpop.f32.mrb[0].mxu0
    %v459 = vpop.f32.mrb[0].mxu0
    %460 = vdwg.mxu0
    %v461 = vxor.u32 %v456, 2147483648
    %v462 = vmul.f32 %v461, 1.442695
    %v463 = vpow.pop %v462
    %v464 = vadd.f32 %v463, 1.0
    %v465 = vrcp.pop %v464
    %v466 = vmul.f32 1.0, %v465
    %v467 = vmul.f32 %v456, %v466
    %v468 = vpack.c.bf16 %v467, %v467
    %v469 = vld [vmem:[#allocation6] sm:$0xf]
    %v470 = vld [vmem:[#allocation6 + $0x4] sm:$0xf]
    %v471 = vld [vmem:[#allocation6 + $0x8] sm:$0xf]
    %v472 = vld [vmem:[#allocation6 + $0xc] sm:$0xf]
    %v473 = vld [vmem:[#allocation6 + $0x10] sm:$0xf]
    %v474 = vld [vmem:[#allocation6 + $0x14] sm:$0xf]
    %v475 = vld [vmem:[#allocation6 + $0x18] sm:$0xf]
    %v476 = vld [vmem:[#allocation6 + $0x1c] sm:$0xf]
    %v477 = vld [vmem:[#allocation6 + $0x20] sm:$0xf]
    %v478 = vld [vmem:[#allocation6 + $0x24] sm:$0xf]
    %v479 = vld [vmem:[#allocation6 + $0x28] sm:$0xf]
    %v480 = vld [vmem:[#allocation6 + $0x2c] sm:$0xf]
    %v481 = vld [vmem:[#allocation6 + $0x30] sm:$0xf]
    %v482 = vld [vmem:[#allocation6 + $0x34] sm:$0xf]
    %v483 = vld [vmem:[#allocation6 + $0x38] sm:$0xf]
    %v484 = vld [vmem:[#allocation6 + $0x3c] sm:$0xf]
    %v485 = vld [vmem:[%s5] sm:$0x1]
    %v487 = vlaneseq
    %v488 = vshrl.u32 %v487, 7
    %v489 = vsub.s32 0, %v488
    %v490 = vrot.slane %v485, %v489
    %v508 = vunpack.c.l.b16 %v469
    %v509 = vunpack.c.l.b16 %v470
    %v510 = vunpack.c.l.b16 %v471
    %v511 = vunpack.c.l.b16 %v472
    %v512 = vunpack.c.l.b16 %v473
    %v513 = vunpack.c.l.b16 %v474
    %v514 = vunpack.c.l.b16 %v475
    %v515 = vunpack.c.l.b16 %v476
    %v516 = vunpack.c.l.b16 %v477
    %v517 = vunpack.c.l.b16 %v478
    %v518 = vunpack.c.l.b16 %v479
    %v519 = vunpack.c.l.b16 %v480
    %v520 = vunpack.c.l.b16 %v481
    %v521 = vunpack.c.l.b16 %v482
    %v522 = vunpack.c.l.b16 %v483
    %v523 = vunpack.c.l.b16 %v484
    %v524 = vpack.c.b16 %v509, %v508
    %v525 = vpack.c.b16 %v511, %v510
    %v526 = vpack.c.b16 %v513, %v512
    %v527 = vpack.c.b16 %v515, %v514
    %v528 = vpack.c.b16 %v517, %v516
    %v529 = vpack.c.b16 %v519, %v518
    %v530 = vpack.c.b16 %v521, %v520
    %v531 = vpack.c.b16 %v523, %v522
    %540 = vmatprep.subr.bf16.mxu0 0
    %541 = vmatpush1.bf16.msra.mxu0 %v524
    %542 = vmatprep.subr.bf16.mxu0 0
    %543 = vmatpush1.bf16.msra.mxu0 %v525
    %544 = vmatprep.subr.bf16.mxu0 0
    %545 = vmatpush1.bf16.msra.mxu0 %v526
    %546 = vmatprep.subr.bf16.mxu0 0
    %547 = vmatpush1.bf16.msra.mxu0 %v527
    %548 = vmatprep.subr.bf16.mxu0 0
    %549 = vmatpush1.bf16.msra.mxu0 %v528
    %550 = vmatprep.subr.bf16.mxu0 0
    %551 = vmatpush1.bf16.msra.mxu0 %v529
    %552 = vmatprep.subr.bf16.mxu0 0
    %553 = vmatpush1.bf16.msra.mxu0 %v530
    %554 = vmatprep.subr.bf16.mxu0 0
    %555 = vmatpush1.bf16.msra.mxu0 %v531
    %556 = vmatprep.subr.bf16.mxu0 0
    %557 = vmatpush1.bf16.msra.mxu0 0
    %558 = vmatprep.subr.bf16.mxu0 0
    %559 = vmatpush1.bf16.msra.mxu0 0
    %560 = vmatprep.subr.bf16.mxu0 0
    %561 = vmatpush1.bf16.msra.mxu0 0
    %562 = vmatprep.subr.bf16.mxu0 0
    %563 = vmatpush1.bf16.msra.mxu0 0
    %564 = vmatprep.subr.bf16.mxu0 0
    %565 = vmatpush1.bf16.msra.mxu0 0
    %566 = vmatprep.subr.bf16.mxu0 0
    %567 = vmatpush1.bf16.msra.mxu0 0
    %568 = vmatprep.subr.bf16.mxu0 0
    %569 = vmatpush1.bf16.msra.mxu0 0
    %570 = vmatprep.subr.bf16.mxu0 0
    %571 = vmatpush1.bf16.msra.mxu0 0
    %572 = vmatprep.mubr.bf16.mxu0 0
    %573 = vmatmul.mubr.bf16.gmra.mrb[0].mxu0 %v468
    %v574 = vpop.f32.mrb[0].mxu0
    %v575 = vadd.f32 %v490, %v574
    %v576 = vpop.f32.mrb[0].mxu0
    %v577 = vpop.f32.mrb[0].mxu0
    %v578 = vpop.f32.mrb[0].mxu0
    %579 = vdwg.mxu0
    %580 = vst [vmem:[#allocation8] sm:$0xff] %v575
    // Predicated region
    $region34: #{tpu_custom_call.1} parent=1 // pred_check
      _
    $region35: #{tpu_custom_call.1} parent=1 // pred_check_branch
      %582 = sbr.rel (0) target = $region37
    $region36: #{tpu_custom_call.1} parent=1 // pred_region
      %s584 = ssub.s32 128, 128
      %585 = vsyncadd [#allocation5], %s584
      %s587 = sshll.u32 [#allocation8], 4
      %s588 = int_to_ptr.vmem [resolvable:$true] %s587
      %590 = dma.vmem_to_hbm [thread:$0]  %s588, 128, %s6, [#allocation5]
    $region37: #{tpu_custom_call.1} parent=1 // pred_fallthru
      _
    // Predicated region
    $region38: #{tpu_custom_call.1} parent=1 // pred_check
      _
    $region39: #{tpu_custom_call.1} parent=1 // pred_check_branch
      %592 = sbr.rel (0) target = $region41
    $region40: #{tpu_custom_call.1} parent=1 // pred_region
      %593 = dma.done [#allocation5], 128
    $region41: #{tpu_custom_call.1} parent=1 // pred_fallthru
      _
    %594 = vsyncpa [#allocation4], 1
    %595 = vsyncpa [#allocation7], 1
    %596 = vsyncpa [#allocation5], 1

</llo_original>
